<compile_context>
chip_gen: v6e
topology: v6e:2x2x1
jax: 0.10.0
libtpu: 0.0.40
codegen_flags: <defaults>
</compile_context>

<pallas_src>
import functools

import jax
import jax.numpy as jnp
from jax.experimental import pallas as pl
from jax.experimental.pallas import tpu as pltpu

_INV_SQRT2 = 0.7071067811865476


def _gelu(x, approx):
    if approx:
        # tanh-approx gelu runs on the EUP slot instead of a long VALU erf poly.
        return jax.nn.gelu(x, approximate=True)
    # exact erf-based gelu, matching StructVBERT's gelu()
    return x * 0.5 * (1.0 + jax.lax.erf(x * _INV_SQRT2))


def _layernorm_onepass(x, gamma, beta, eps=1e-12):
    # Single-pass statistics: sum and sum-of-squares are independent lane
    # reductions (var = E[x^2] - E[x]^2), halving the serial XLU chain that
    # sits between the transform matmul and the fused decoder matmul.
    inv_n = 1.0 / x.shape[-1]
    s1 = jnp.sum(x, axis=-1, keepdims=True)
    s2 = jnp.sum(x * x, axis=-1, keepdims=True)
    mu = s1 * inv_n
    var = s2 * inv_n - mu * mu
    # Zero-padded rows produce a constant row after the dense bias -> var ~= 0,
    # which can round slightly negative with the one-pass formula.  Clamp so
    # rsqrt stays finite; padded rows are sliced off in the wrapper anyway.
    var = jnp.maximum(var, 0.0)
    return (x - mu) * jax.lax.rsqrt(var + eps) * gamma + beta


def _head_kernel(h_ref, wt_ref, tconst_ref, wd_ref, bd_ref, out_ref,
                 *, compute_dtype, approx_gelu):
    # ---- BertPredictionHeadTransform: Linear + gelu + LayerNorm (f32 stats) ----
    h = h_ref[...].astype(compute_dtype)          # in-kernel cast (hidden under DMA)
    t = jnp.dot(h, wt_ref[...], preferred_element_type=jnp.float32)
    t = t + tconst_ref[0:1, :]                    # dense bias
    t = _gelu(t, approx_gelu)
    t = _layernorm_onepass(t, tconst_ref[1:2, :], tconst_ref[2:3, :])

    td = t.astype(compute_dtype)

    # ---- fused decoder_dict linears: ONE lane-dense MXU matmul + full vst ----
    out_ref[...] = (jnp.dot(td, wd_ref[...], preferred_element_type=jnp.float32)
                    + bd_ref[...]).astype(out_ref.dtype)


def _round_up(x, m):
    return ((x + m - 1) // m) * m


def _pad_cols(w, b, dpad):
    d = w.shape[1]
    if dpad == d:
        return w, b
    return (jnp.pad(w, ((0, 0), (0, dpad - d))),
            jnp.pad(b, ((0, dpad - d),)))


def _vmem_limit_bytes():
    # Generation-dependent VMEM limit: ~48 MiB on v7x (64 MiB/core physical),
    # ~96 MiB on v5e/v6e (128 MiB physical).  Falls back to 48 MiB if the
    # hardware query is unavailable.
    cap = None
    try:
        cap = getattr(pltpu.get_tpu_info(), "vmem_capacity_bytes", None)
    except Exception:
        cap = None
    if not cap:
        cap = 64 << 20
    return max(32 << 20, min((cap * 3) // 4, 100 << 20))


def bert_visual_obj_head(hidden_states, params, *, tile_m=512, use_bf16=True,
                         approx_gelu=False, out_dtype=jnp.float32):
    """hidden_states: [B, S, H] f32 -> dict of [B, S, Dk] for obj/attr/feat."""
    B, S, H = hidden_states.shape
    d_obj = params["obj_w"].shape[1]
    d_attr = params["attr_w"].shape[1]
    d_feat = params["feat_w"].shape[1]

    # Column-pad each head to a multiple of 128 and fuse all decoders into a
    # single [H, d_total] weight + [1, d_total] bias -> one matmul, unmasked stores.
    dp_obj = _round_up(d_obj, 128)
    dp_attr = _round_up(d_attr, 128)
    dp_feat = _round_up(d_feat, 128)
    d_total = dp_obj + dp_attr + dp_feat

    N = B * S
    # Big row tiles, but:
    #  * multiple of 16 so a bf16 activation tile keeps native (16,128) tiling
    #  * capped so the row grid has >= 2 steps (both v7x TensorCores get work)
    tm = max(16, min(tile_m, _round_up(pl.cdiv(N, 2), 16)))
    Np = _round_up(N, tm)                  # pad rows instead of asserting divisibility

    compute_dtype = jnp.bfloat16 if use_bf16 else jnp.float32

    # No wrapper-side dtype cast: stream the f32 activation once, cast in-kernel.
    h2 = hidden_states.reshape(N, H)
    if Np != N:
        h2 = jnp.pad(h2, ((0, Np - N), (0, 0)))

    wo, bo = _pad_cols(params["obj_w"], params["obj_b"], dp_obj)
    wa, ba = _pad_cols(params["attr_w"], params["attr_b"], dp_attr)
    wf, bf = _pad_cols(params["feat_w"], params["feat_b"], dp_feat)
    wd = jnp.concatenate([wo, wa, wf], axis=1).astype(compute_dtype)
    bd = jnp.concatenate([bo, ba, bf], axis=0).reshape(1, d_total).astype(jnp.float32)

    # Stacked transform constants: [dense bias ; LN gamma ; LN beta] -> one operand.
    tconst = jnp.stack(
        [params["t_b"], params["t_ln_g"], params["t_ln_b"]], axis=0
    ).astype(jnp.float32)
    wt = params["t_w"].astype(compute_dtype)

    def resident(shape):
        # Constant-index operands never change across the grid: single-buffer them.
        try:
            return pl.BlockSpec(shape, lambda i: (0, 0),
                                pipeline_mode=pl.Buffered(1))
        except TypeError:  # older BlockSpec signature without pipeline_mode
            return pl.BlockSpec(shape, lambda i: (0, 0))

    kernel = functools.partial(_head_kernel, compute_dtype=compute_dtype,
                               approx_gelu=approx_gelu)

    out = pl.pallas_call(
        kernel,
        out_shape=jax.ShapeDtypeStruct((Np, d_total), out_dtype),
        grid_spec=pltpu.PrefetchScalarGridSpec(
            num_scalar_prefetch=0,
            grid=(Np // tm,),
            in_specs=[
                pl.BlockSpec((tm, H), lambda i: (i, 0)),  # hidden rows (pipelined)
                resident((H, H)),                         # transform dense weight
                resident((3, H)),                         # bias / LN gamma / LN beta
                resident((H, d_total)),                   # fused decoder weight
                resident((1, d_total)),                   # fused decoder bias
            ],
            out_specs=pl.BlockSpec((tm, d_total), lambda i: (i, 0)),
        ),
        compiler_params=pltpu.CompilerParams(
            dimension_semantics=("parallel",),            # v7x: shard rows over 2 TCs
            vmem_limit_bytes=_vmem_limit_bytes(),
        ),
    )(h2, wt, tconst, wd, bd)

    out = out[:N]
    obj = out[:, :d_obj].reshape(B, S, d_obj)
    attr = out[:, dp_obj:dp_obj + d_attr].reshape(B, S, d_attr)
    feat = out[:, dp_obj + dp_attr:dp_obj + dp_attr + d_feat].reshape(B, S, d_feat)
    return {"obj": obj, "attr": attr, "feat": feat}


def _reference(hidden_states, params):
    """Pure-JAX reference mirroring the PyTorch forward."""
    t = jnp.einsum("bsh,hk->bsk", hidden_states, params["t_w"]) + params["t_b"]
    t = t * 0.5 * (1.0 + jax.lax.erf(t * _INV_SQRT2))
    mu = jnp.mean(t, axis=-1, keepdims=True)
    var = jnp.mean((t - mu) ** 2, axis=-1, keepdims=True)
    t = (t - mu) * jax.lax.rsqrt(var + 1e-12) * params["t_ln_g"] + params["t_ln_b"]
    return {
        "obj": jnp.einsum("bsh,hk->bsk", t, params["obj_w"]) + params["obj_b"],
        "attr": jnp.einsum("bsh,hk->bsk", t, params["attr_w"]) + params["attr_b"],
        "feat": jnp.einsum("bsh,hk->bsk", t, params["feat_w"]) + params["feat_b"],
    }


if __name__ == "__main__":
    # Small synthetic config (stands in for hidden=768, obj=1600, attr=400,
    # feat=2048).  d_obj/d_attr deliberately NOT multiples of 128 to exercise
    # the wrapper-side column padding / slicing.
    B, S = 2, 8
    HIDDEN = 128
    D_OBJ, D_ATTR, D_FEAT = 200, 144, 256

    key = jax.random.PRNGKey(0)
    ks = jax.random.split(key, 10)

    params = {
        "t_w": 0.02 * jax.random.normal(ks[0], (HIDDEN, HIDDEN), jnp.float32),
        "t_b": 0.02 * jax.random.normal(ks[1], (HIDDEN,), jnp.float32),
        "t_ln_g": jnp.ones((HIDDEN,), jnp.float32),
        "t_ln_b": jnp.zeros((HIDDEN,), jnp.float32),
        "obj_w": 0.02 * jax.random.normal(ks[2], (HIDDEN, D_OBJ), jnp.float32),
        "obj_b": 0.02 * jax.random.normal(ks[3], (D_OBJ,), jnp.float32),
        "attr_w": 0.02 * jax.random.normal(ks[4], (HIDDEN, D_ATTR), jnp.float32),
        "attr_b": 0.02 * jax.random.normal(ks[5], (D_ATTR,), jnp.float32),
        "feat_w": 0.02 * jax.random.normal(ks[6], (HIDDEN, D_FEAT), jnp.float32),
        "feat_b": 0.02 * jax.random.normal(ks[7], (D_FEAT,), jnp.float32),
    }
    hidden = jax.random.normal(ks[8], (B, S, HIDDEN), jnp.float32)

    ref = _reference(hidden, params)

    # f32 path: tight check against the PyTorch-equivalent reference.
    out = bert_visual_obj_head(hidden, params, use_bf16=False)
    out = jax.block_until_ready(out)
    for k in ("obj", "attr", "feat"):
        assert out[k].shape == ref[k].shape
        assert jnp.allclose(out[k], ref[k], atol=1e-3, rtol=1e-3), f"f32 mismatch: {k}"

    # Default bf16-operand path: loose check (MXU operands bf16, stats f32).
    out_bf16 = bert_visual_obj_head(hidden, params)      # use_bf16=True default
    out_bf16 = jax.block_until_ready(out_bf16)
    for k in ("obj", "attr", "feat"):
        assert out_bf16[k].shape == ref[k].shape
        assert jnp.allclose(out_bf16[k], ref[k], atol=5e-2, rtol=5e-2), f"bf16 mismatch: {k}"

    print("KERNEL_OK")
</pallas_src>

<mosaic_0001>
module attributes {stable_mosaic.version = 11 : i64} {
  func.func @_head_kernel(%arg0: i32, %arg1: memref<16x128xf32, #tpu.memory_space<vmem>>, %arg2: memref<128x128xf32, #tpu.memory_space<vmem>>, %arg3: memref<3x128xf32, #tpu.memory_space<vmem>>, %arg4: memref<128x768xf32, #tpu.memory_space<vmem>>, %arg5: memref<1x768xf32, #tpu.memory_space<vmem>>, %arg6: memref<16x768xf32, #tpu.memory_space<vmem>>) attributes {dimension_semantics = [#tpu.dimension_semantics<parallel>], iteration_bounds = array<i64: 1>, scalar_prefetch = 0 : i64, scratch_operands = 0 : i64, tpu.core_type = #tpu.core_type<tc>, window_params = [{transform_indices = @transform_0, window_bounds = array<i64: 16, 128>}, {pipeline_mode = #tpu.pipeline_mode<synchronous>, transform_indices = @transform_1, window_bounds = array<i64: 128, 128>}, {pipeline_mode = #tpu.pipeline_mode<synchronous>, transform_indices = @transform_2, window_bounds = array<i64: 3, 128>}, {pipeline_mode = #tpu.pipeline_mode<synchronous>, transform_indices = @transform_3, window_bounds = array<i64: 128, 768>}, {pipeline_mode = #tpu.pipeline_mode<synchronous>, transform_indices = @transform_4, window_bounds = array<i64: 1, 768>}, {transform_indices = @transform_5, window_bounds = array<i64: 16, 768>}]} {
    %c0 = arith.constant 0 : index
    %c0_0 = arith.constant 0 : index
    %0 = vector.load %arg1[%c0, %c0_0] : memref<16x128xf32, #tpu.memory_space<vmem>>, vector<16x128xf32>
    %c0_1 = arith.constant 0 : index
    %c0_2 = arith.constant 0 : index
    %1 = vector.load %arg2[%c0_1, %c0_2] : memref<128x128xf32, #tpu.memory_space<vmem>>, vector<128x128xf32>
    %cst = arith.constant dense<0.000000e+00> : vector<16x128xf32>
    %2 = tpu.matmul %0, %1, %cst {dimension_numbers = #tpu.dot_dimension_numbers<[1], [0], [0], [1], [0, 0, 1, 1], [], []>} : vector<16x128xf32>, vector<128x128xf32>, vector<16x128xf32> -> vector<16x128xf32>
    %c0_3 = arith.constant 0 : index
    %c0_4 = arith.constant 0 : index
    %3 = vector.load %arg3[%c0_3, %c0_4] : memref<3x128xf32, #tpu.memory_space<vmem>>, vector<1x128xf32>
    %4 = vector.broadcast %3 : vector<1x128xf32> to vector<16x128xf32>
    %5 = arith.addf %2, %4 : vector<16x128xf32>
    %cst_5 = arith.constant 5.000000e-01 : f32
    %6 = vector.broadcast %cst_5 : f32 to vector<16x128xf32>
    %7 = arith.mulf %5, %6 : vector<16x128xf32>
    %cst_6 = arith.constant 0.707106769 : f32
    %8 = vector.broadcast %cst_6 : f32 to vector<16x128xf32>
    %9 = arith.mulf %5, %8 : vector<16x128xf32>
    %10 = math.erf %9 : vector<16x128xf32>
    %cst_7 = arith.constant 1.000000e+00 : f32
    %11 = vector.broadcast %cst_7 : f32 to vector<16x128xf32>
    %12 = arith.addf %11, %10 : vector<16x128xf32>
    %13 = arith.mulf %7, %12 : vector<16x128xf32>
    %c1 = arith.constant 1 : index
    %c0_8 = arith.constant 0 : index
    %14 = vector.load %arg3[%c1, %c0_8] : memref<3x128xf32, #tpu.memory_space<vmem>>, vector<1x128xf32>
    %c2 = arith.constant 2 : index
    %c0_9 = arith.constant 0 : index
    %15 = vector.load %arg3[%c2, %c0_9] : memref<3x128xf32, #tpu.memory_space<vmem>>, vector<1x128xf32>
    %cst_10 = arith.constant dense<0.000000e+00> : vector<16xf32>
    %16 = vector.multi_reduction <add>, %13, %cst_10 [1] : vector<16x128xf32> to vector<16xf32>
    %17 = vector.shape_cast %16 : vector<16xf32> to vector<16x1xf32>
    %18 = arith.mulf %13, %13 : vector<16x128xf32>
    %cst_11 = arith.constant dense<0.000000e+00> : vector<16xf32>
    %19 = vector.multi_reduction <add>, %18, %cst_11 [1] : vector<16x128xf32> to vector<16xf32>
    %20 = vector.shape_cast %19 : vector<16xf32> to vector<16x1xf32>
    %cst_12 = arith.constant 7.812500e-03 : f32
    %21 = vector.broadcast %cst_12 : f32 to vector<16x1xf32>
    %22 = arith.mulf %17, %21 : vector<16x1xf32>
    %cst_13 = arith.constant 7.812500e-03 : f32
    %23 = vector.broadcast %cst_13 : f32 to vector<16x1xf32>
    %24 = arith.mulf %20, %23 : vector<16x1xf32>
    %25 = arith.mulf %22, %22 : vector<16x1xf32>
    %26 = arith.subf %24, %25 : vector<16x1xf32>
    %cst_14 = arith.constant 0.000000e+00 : f32
    %27 = vector.broadcast %cst_14 : f32 to vector<16x1xf32>
    %28 = arith.maximumf %26, %27 : vector<16x1xf32>
    %29 = vector.broadcast %22 : vector<16x1xf32> to vector<16x128xf32>
    %30 = arith.subf %13, %29 : vector<16x128xf32>
    %cst_15 = arith.constant 9.99999996E-13 : f32
    %31 = vector.broadcast %cst_15 : f32 to vector<16x1xf32>
    %32 = arith.addf %28, %31 : vector<16x1xf32>
    %33 = math.rsqrt %32 : vector<16x1xf32>
    %34 = vector.broadcast %33 : vector<16x1xf32> to vector<16x128xf32>
    %35 = arith.mulf %30, %34 : vector<16x128xf32>
    %36 = vector.broadcast %14 : vector<1x128xf32> to vector<16x128xf32>
    %37 = arith.mulf %35, %36 : vector<16x128xf32>
    %38 = vector.broadcast %15 : vector<1x128xf32> to vector<16x128xf32>
    %39 = arith.addf %37, %38 : vector<16x128xf32>
    %c0_16 = arith.constant 0 : index
    %c0_17 = arith.constant 0 : index
    %40 = vector.load %arg4[%c0_16, %c0_17] : memref<128x768xf32, #tpu.memory_space<vmem>>, vector<128x768xf32>
    %cst_18 = arith.constant dense<0.000000e+00> : vector<16x768xf32>
    %41 = tpu.matmul %39, %40, %cst_18 {dimension_numbers = #tpu.dot_dimension_numbers<[1], [0], [0], [1], [0, 0, 1, 1], [], []>} : vector<16x128xf32>, vector<128x768xf32>, vector<16x768xf32> -> vector<16x768xf32>
    %c0_19 = arith.constant 0 : index
    %c0_20 = arith.constant 0 : index
    %42 = vector.load %arg5[%c0_19, %c0_20] : memref<1x768xf32, #tpu.memory_space<vmem>>, vector<1x768xf32>
    %43 = vector.broadcast %42 : vector<1x768xf32> to vector<16x768xf32>
    %44 = arith.addf %41, %43 : vector<16x768xf32>
    %c0_21 = arith.constant 0 : index
    %c0_22 = arith.constant 0 : index
    %45 = vector.load %arg6[%c0_21, %c0_22] : memref<16x768xf32, #tpu.memory_space<vmem>>, vector<16x768xf32>
    tpu.vector_store %arg6[%c0_21, %c0_22], %44 {strides = array<i32>} : memref<16x768xf32, #tpu.memory_space<vmem>>, vector<16x768xf32>,
    return
  }
  func.func @transform_0(%arg0: i32) -> (i32, i32) {
    %c0_i32 = arith.constant 0 : i32
    %c0_i32_0 = arith.constant 0 : i32
    return %arg0, %c0_i32 : i32, i32
  }
  func.func @transform_1(%arg0: i32) -> (i32, i32) {
    %c0_i32 = arith.constant 0 : i32
    %c0_i32_0 = arith.constant 0 : i32
    %c0_i32_1 = arith.constant 0 : i32
    return %c0_i32, %c0_i32_0 : i32, i32
  }
  func.func @transform_2(%arg0: i32) -> (i32, i32) {
    %c0_i32 = arith.constant 0 : i32
    %c0_i32_0 = arith.constant 0 : i32
    %c0_i32_1 = arith.constant 0 : i32
    return %c0_i32, %c0_i32_0 : i32, i32
  }
  func.func @transform_3(%arg0: i32) -> (i32, i32) {
    %c0_i32 = arith.constant 0 : i32
    %c0_i32_0 = arith.constant 0 : i32
    %c0_i32_1 = arith.constant 0 : i32
    return %c0_i32, %c0_i32_0 : i32, i32
  }
  func.func @transform_4(%arg0: i32) -> (i32, i32) {
    %c0_i32 = arith.constant 0 : i32
    %c0_i32_0 = arith.constant 0 : i32
    %c0_i32_1 = arith.constant 0 : i32
    return %c0_i32, %c0_i32_0 : i32, i32
  }
  func.func @transform_5(%arg0: i32) -> (i32, i32) {
    %c0_i32 = arith.constant 0 : i32
    %c0_i32_0 = arith.constant 0 : i32
    return %arg0, %c0_i32 : i32, i32
  }
}

</mosaic_0001>

<llo_original>
// kernel: tpu_custom_call.1
$region0: #{tpu_custom_call.1}
  #allocation0 [shape = 'u32[]', space=smem, size = 0x4, offset = 0x4, fixed_abs, tag = 'smem constant byte address 0x4 - core index']
  #allocation1 [shape = 'u32[144,128]{1,0:T(1,128)}', space=vmem, size = 0x12000, scoped, tag = 'internal scratch']
  %s0 = inlined_call_operand.hbm [shape: f32[16,128], index: 0, kind: input, shape index: {}]
  %s1 = inlined_call_operand.hbm [shape: f32[128,128], index: 1, kind: input, shape index: {}]
  %s2 = inlined_call_operand.hbm [shape: f32[3,128], index: 2, kind: input, shape index: {}]
  %s3 = inlined_call_operand.hbm [shape: f32[128,768], index: 3, kind: input, shape index: {}]
  %s4 = inlined_call_operand.vmem [shape: f32[1,768], index: 4, kind: input, shape index: {}]
  %s5 = inlined_call_operand.hbm [shape: f32[16,768], index: 5, kind: output, shape index: {}]
  %s6 = sld [smem:[#allocation0]]
  $region46: #{tpu_custom_call.1} parent=0
    _
  %s8 = ssub.s32 1, %s6
  %s9 = scalar_select 0, %s8, %s6
  $region1: #{tpu_custom_call.1} parent=0
    #allocation2 [shape = 'u8[8192]{0}', space=vmem, size = 0x2000, scoped, tag = 'input window, operand 0, single buffered']
    #allocation3 [shape = 's32[1]{0}', space=sflag, size = 0x4, scoped, tag = 'scoped memory for tpu_custom_call.1']
    #allocation4 [shape = 's32[1]{0}', space=sflag, size = 0x4, scoped, tag = 'scoped memory for tpu_custom_call.1']
    #allocation5 [shape = 'u8[65536]{0}', space=vmem, size = 0x10000, scoped, tag = 'input window, operand 1, single buffered']
    #allocation6 [shape = 's32[1]{0}', space=sflag, size = 0x4, scoped, tag = 'scoped memory for tpu_custom_call.1']
    #allocation7 [shape = 'u8[2048]{0}', space=vmem, size = 0x800, scoped, tag = 'input window, operand 2, single buffered']
    #allocation8 [shape = 'u8[393216]{0}', space=vmem, size = 0x60000, scoped, tag = 'input window, operand 3, single buffered']
    #allocation9 [shape = 's32[1]{0}', space=sflag, size = 0x4, scoped, tag = 'scoped memory for tpu_custom_call.1']
    #allocation10 [shape = 'u8[49152]{0}', space=vmem, size = 0xc000, scoped, tag = 'output window, operand 0, single buffered']
    %10 = vsyncpa [#allocation3], 0
    %11 = vsyncpa [#allocation6], 0
    %12 = vsyncpa [#allocation9], 0
    %13 = vsyncpa [#allocation4], 0
    // Predicated region
    $region2: #{tpu_custom_call.1} parent=1 // pred_check
      _
    $region3: #{tpu_custom_call.1} parent=1 // pred_check_branch
      %15 = sbr.rel (0) target = $region5
    $region4: #{tpu_custom_call.1} parent=1 // pred_region
      %s17 = ssub.s32 256, 256
      %18 = vsyncadd [#allocation3], %s17
      %s19 = sshll.u32 [#allocation2], 4
      %s20 = int_to_ptr.vmem [resolvable:$true] %s19
      %25 = dma.hbm_to_vmem [thread:$0]  %s0, 256, %s20, [#allocation3], 128, 128, 8
    $region5: #{tpu_custom_call.1} parent=1 // pred_fallthru
      _
    // Predicated region
    $region6: #{tpu_custom_call.1} parent=1 // pred_check
      _
    $region7: #{tpu_custom_call.1} parent=1 // pred_check_branch
      %27 = sbr.rel (0) target = $region9
    $region8: #{tpu_custom_call.1} parent=1 // pred_region
      %s29 = ssub.s32 2048, 2048
      %30 = vsyncadd [#allocation6], %s29
      %s31 = sshll.u32 [#allocation5], 4
      %s32 = int_to_ptr.vmem [resolvable:$true] %s31
      %37 = dma.hbm_to_vmem [thread:$0]  %s1, 2048, %s32, [#allocation6], 128, 128, 8
    $region9: #{tpu_custom_call.1} parent=1 // pred_fallthru
      _
    // Predicated region
    $region10: #{tpu_custom_call.1} parent=1 // pred_check
      _
    $region11: #{tpu_custom_call.1} parent=1 // pred_check_branch
      %39 = sbr.rel (0) target = $region13
    $region12: #{tpu_custom_call.1} parent=1 // pred_region
      %s41 = ssub.s32 64, 64
      %42 = vsyncadd [#allocation6], %s41
      %s44 = sshll.u32 [#allocation7], 4
      %s45 = int_to_ptr.vmem [resolvable:$true] %s44
      %47 = dma.hbm_to_vmem [thread:$0]  %s2, 64, %s45, [#allocation6]
    $region13: #{tpu_custom_call.1} parent=1 // pred_fallthru
      _
    // Predicated region
    $region14: #{tpu_custom_call.1} parent=1 // pred_check
      _
    $region15: #{tpu_custom_call.1} parent=1 // pred_check_branch
      %49 = sbr.rel (0) target = $region17
    $region16: #{tpu_custom_call.1} parent=1 // pred_region
      %s51 = ssub.s32 12288, 12288
      %52 = vsyncadd [#allocation9], %s51
      %s53 = sshll.u32 [#allocation8], 4
      %s54 = int_to_ptr.vmem [resolvable:$true] %s53
      %59 = dma.hbm_to_vmem [thread:$0]  %s3, 12288, %s54, [#allocation9], 768, 768, 48
    $region17: #{tpu_custom_call.1} parent=1 // pred_fallthru
      _
    // Predicated region
    $region18: #{tpu_custom_call.1} parent=1 // pred_check
      _
    $region19: #{tpu_custom_call.1} parent=1 // pred_check_branch
      %61 = sbr.rel (0) target = $region21
    $region20: #{tpu_custom_call.1} parent=1 // pred_region
      _
    $region21: #{tpu_custom_call.1} parent=1 // pred_fallthru
      _
    // Predicated region
    $region22: #{tpu_custom_call.1} parent=1 // pred_check
      _
    $region23: #{tpu_custom_call.1} parent=1 // pred_check_branch
      %63 = sbr.rel (0) target = $region25
    $region24: #{tpu_custom_call.1} parent=1 // pred_region
      %64 = dma.done [#allocation3], 256
    $region25: #{tpu_custom_call.1} parent=1 // pred_fallthru
      _
    // Predicated region
    $region26: #{tpu_custom_call.1} parent=1 // pred_check
      _
    $region27: #{tpu_custom_call.1} parent=1 // pred_check_branch
      %66 = sbr.rel (0) target = $region29
    $region28: #{tpu_custom_call.1} parent=1 // pred_region
      %67 = dma.done [#allocation6], 2048
    $region29: #{tpu_custom_call.1} parent=1 // pred_fallthru
      _
    // Predicated region
    $region30: #{tpu_custom_call.1} parent=1 // pred_check
      _
    $region31: #{tpu_custom_call.1} parent=1 // pred_check_branch
      %69 = sbr.rel (0) target = $region33
    $region32: #{tpu_custom_call.1} parent=1 // pred_region
      %70 = dma.done [#allocation6], 64
    $region33: #{tpu_custom_call.1} parent=1 // pred_fallthru
      _
    // Predicated region
    $region34: #{tpu_custom_call.1} parent=1 // pred_check
      _
    $region35: #{tpu_custom_call.1} parent=1 // pred_check_branch
      %72 = sbr.rel (0) target = $region37
    $region36: #{tpu_custom_call.1} parent=1 // pred_region
      %73 = dma.done [#allocation9], 12288
    $region37: #{tpu_custom_call.1} parent=1 // pred_fallthru
      _
    %v74 = vld [vmem:[#allocation2] sm:$0xff]
    %v75 = vld [vmem:[#allocation2 + $0x8] sm:$0xff]
    %v76 = vld [vmem:[#allocation5] sm:$0xff]
    %v77 = vld [vmem:[#allocation5 + $0x8] sm:$0xff]
    %v78 = vld [vmem:[#allocation5 + $0x10] sm:$0xff]
    %v79 = vld [vmem:[#allocation5 + $0x18] sm:$0xff]
    %v80 = vld [vmem:[#allocation5 + $0x20] sm:$0xff]
    %v81 = vld [vmem:[#allocation5 + $0x28] sm:$0xff]
    %v82 = vld [vmem:[#allocation5 + $0x30] sm:$0xff]
    %v83 = vld [vmem:[#allocation5 + $0x38] sm:$0xff]
    %v84 = vld [vmem:[#allocation5 + $0x40] sm:$0xff]
    %v85 = vld [vmem:[#allocation5 + $0x48] sm:$0xff]
    %v86 = vld [vmem:[#allocation5 + $0x50] sm:$0xff]
    %v87 = vld [vmem:[#allocation5 + $0x58] sm:$0xff]
    %v88 = vld [vmem:[#allocation5 + $0x60] sm:$0xff]
    %v89 = vld [vmem:[#allocation5 + $0x68] sm:$0xff]
    %v90 = vld [vmem:[#allocation5 + $0x70] sm:$0xff]
    %v91 = vld [vmem:[#allocation5 + $0x78] sm:$0xff]
    %v92 = vld [vmem:[#allocation7] sm:$0x1]
    %v93 = vlaneseq
    %v94 = vshrl.u32 %v93, 7
    %v95 = vsub.s32 0, %v94
    %v96 = vrot.slane %v92, %v95
    %97 = vmatprep.subr.mxu0 0.0
    %98 = vmatpush1.msra.mxu0 %v91
    %99 = vmatprep.subr.mxu0 0.0
    %100 = vmatpush1.msra.mxu0 %v90
    %101 = vmatprep.subr.mxu0 0.0
    %102 = vmatpush1.msra.mxu0 %v89
    %103 = vmatprep.subr.mxu0 0.0
    %104 = vmatpush1.msra.mxu0 %v88
    %105 = vmatprep.subr.mxu0 0.0
    %106 = vmatpush1.msra.mxu0 %v87
    %107 = vmatprep.subr.mxu0 0.0
    %108 = vmatpush1.msra.mxu0 %v86
    %109 = vmatprep.subr.mxu0 0.0
    %110 = vmatpush1.msra.mxu0 %v85
    %111 = vmatprep.subr.mxu0 0.0
    %112 = vmatpush1.msra.mxu0 %v84
    %113 = vmatprep.subr.mxu0 0.0
    %114 = vmatpush1.msra.mxu0 %v83
    %115 = vmatprep.subr.mxu0 0.0
    %116 = vmatpush1.msra.mxu0 %v82
    %117 = vmatprep.subr.mxu0 0.0
    %118 = vmatpush1.msra.mxu0 %v81
    %119 = vmatprep.subr.mxu0 0.0
    %120 = vmatpush1.msra.mxu0 %v80
    %121 = vmatprep.subr.mxu0 0.0
    %122 = vmatpush1.msra.mxu0 %v79
    %123 = vmatprep.subr.mxu0 0.0
    %124 = vmatpush1.msra.mxu0 %v78
    %125 = vmatprep.subr.mxu0 0.0
    %126 = vmatpush1.msra.mxu0 %v77
    %127 = vmatprep.subr.mxu0 0.0
    %128 = vmatpush1.msra.mxu0 %v76
    %129 = vmatprep.subr.mxu0 0.0
    %130 = vmatpush2.msra.mxu0 0.0
    %131 = vmatprep.subr.mxu0 0.0
    %132 = vmatpush2.msra.mxu0 0.0
    %133 = vmatprep.subr.mxu0 0.0
    %134 = vmatpush2.msra.mxu0 0.0
    %135 = vmatprep.subr.mxu0 0.0
    %136 = vmatpush2.msra.mxu0 0.0
    %137 = vmatprep.subr.mxu0 0.0
    %138 = vmatpush2.msra.mxu0 0.0
    %139 = vmatprep.subr.mxu0 0.0
    %140 = vmatpush2.msra.mxu0 0.0
    %141 = vmatprep.subr.mxu0 0.0
    %142 = vmatpush2.msra.mxu0 0.0
    %143 = vmatprep.subr.mxu0 0.0
    %144 = vmatpush2.msra.mxu0 0.0
    %145 = vmatprep.subr.mxu0 0.0
    %146 = vmatpush2.msra.mxu0 0.0
    %147 = vmatprep.subr.mxu0 0.0
    %148 = vmatpush2.msra.mxu0 0.0
    %149 = vmatprep.subr.mxu0 0.0
    %150 = vmatpush2.msra.mxu0 0.0
    %151 = vmatprep.subr.mxu0 0.0
    %152 = vmatpush2.msra.mxu0 0.0
    %153 = vmatprep.subr.mxu0 0.0
    %154 = vmatpush2.msra.mxu0 0.0
    %155 = vmatprep.subr.mxu0 0.0
    %156 = vmatpush2.msra.mxu0 0.0
    %157 = vmatprep.subr.mxu0 0.0
    %158 = vmatpush2.msra.mxu0 0.0
    %159 = vmatprep.subr.mxu0 0.0
    %160 = vmatpush2.msra.mxu0 0.0
    %161 = vmatprep.mubr.f32.mxu0 0.0
    %162 = vmatmul.mubr.f32.gmra.mxu0 %v74
    %v163 = vpop.f32.mrf.mxu0
    %v164 = vadd.f32 %v96, %v163
    %v165 = vpop.f32.mrf.mxu0
    %166 = vmatprep.mubr.f32.mxu0 0.0
    %167 = vmatmul.mubr.f32.gmra.mxu0 %v75
    %v168 = vpop.f32.mrf.mxu0
    %v169 = vadd.f32 %v96, %v168
    %v170 = vpop.f32.mrf.mxu0
    %171 = vdwg.mxu0
    %v172 = vmul.f32 %v164, 0.5
    %v173 = vmul.f32 %v169, 0.5
    %v174 = vmul.f32 %v164, 0.70710677
    %v175 = vmul.f32 %v169, 0.70710677
    %v176 = verf.f32.pop %v174
    %v177 = verf.f32.pop %v175
    %v178 = vadd.f32 %v176, 1.0
    %v179 = vadd.f32 %v177, 1.0
    %v180 = vmul.f32 %v172, %v178
    %v181 = vmul.f32 %v173, %v179
    %v182 = vld [vmem:[#allocation7 + $0x1] sm:$0x1]
    %v183 = vld [vmem:[#allocation7 + $0x2] sm:$0x1]
    %184 = vadd.xlane.f32.xlu0 %v180
    %v185 = vpop.xlane.xlu0 %184
    %186 = vadd.xlane.f32.xlu0 %v181
    %v187 = vpop.xlane.xlu0 %186
    %v188 = vmul.f32 %v180, %v180
    %v189 = vmul.f32 %v181, %v181
    %190 = vadd.xlane.f32.xlu0 %v188
    %v191 = vpop.xlane.xlu0 %190
    %192 = vadd.xlane.f32.xlu0 %v189
    %v193 = vpop.xlane.xlu0 %192
    %v194 = vmul.f32 %v185, 0.0078125
    %v195 = vmul.f32 %v187, 0.0078125
    %v196 = vmul.f32 %v191, 0.0078125
    %v197 = vmul.f32 %v193, 0.0078125
    %v198 = vmul.f32 %v194, %v194
    %v199 = vmul.f32 %v195, %v195
    %v200 = vsub.f32 %v196, %v198
    %v201 = vsub.f32 %v197, %v199
    %v202 = vmax.f32 %v200, 0.0
    %v203 = vmax.f32 %v201, 0.0
    %v204 = vsub.f32 %v180, %v194
    %v205 = vsub.f32 %v181, %v195
    %v206 = vadd.f32 %v202, 1e-12
    %v207 = vadd.f32 %v203, 1e-12
    %v208 = vrsqrt.pop %v206
    %v209 = vrsqrt.pop %v207
    %v210 = vmul.f32 %v204, %v208
    %v211 = vmul.f32 %v205, %v209
    %v212 = vlaneseq
    %v213 = vshrl.u32 %v212, 7
    %v214 = vsub.s32 0, %v213
    %v215 = vrot.slane %v182, %v214
    %v216 = vmul.f32 %v210, %v215
    %v217 = vmul.f32 %v211, %v215
    %v218 = vlaneseq
    %v219 = vshrl.u32 %v218, 7
    %v220 = vsub.s32 0, %v219
    %v221 = vrot.slane %v183, %v220
    %v222 = vadd.f32 %v216, %v221
    %v223 = vadd.f32 %v217, %v221
    %v224 = vld [vmem:[#allocation8] sm:$0xff]
    %v225 = vld [vmem:[#allocation8 + $0x8] sm:$0xff]
    %v226 = vld [vmem:[#allocation8 + $0x10] sm:$0xff]
    %v227 = vld [vmem:[#allocation8 + $0x18] sm:$0xff]
    %v228 = vld [vmem:[#allocation8 + $0x20] sm:$0xff]
    %v229 = vld [vmem:[#allocation8 + $0x28] sm:$0xff]
    %v230 = vld [vmem:[#allocation8 + $0x30] sm:$0xff]
    %v231 = vld [vmem:[#allocation8 + $0x38] sm:$0xff]
    %v232 = vld [vmem:[#allocation8 + $0x40] sm:$0xff]
    %v233 = vld [vmem:[#allocation8 + $0x48] sm:$0xff]
    %v234 = vld [vmem:[#allocation8 + $0x50] sm:$0xff]
    %v235 = vld [vmem:[#allocation8 + $0x58] sm:$0xff]
    %v236 = vld [vmem:[#allocation8 + $0x60] sm:$0xff]
    %v237 = vld [vmem:[#allocation8 + $0x68] sm:$0xff]
    %v238 = vld [vmem:[#allocation8 + $0x70] sm:$0xff]
    %v239 = vld [vmem:[#allocation8 + $0x78] sm:$0xff]
    %v240 = vld [vmem:[#allocation8 + $0x80] sm:$0xff]
    %v241 = vld [vmem:[#allocation8 + $0x88] sm:$0xff]
    %v242 = vld [vmem:[#allocation8 + $0x90] sm:$0xff]
    %v243 = vld [vmem:[#allocation8 + $0x98] sm:$0xff]
    %v244 = vld [vmem:[#allocation8 + $0xa0] sm:$0xff]
    %v245 = vld [vmem:[#allocation8 + $0xa8] sm:$0xff]
    %v246 = vld [vmem:[#allocation8 + $0xb0] sm:$0xff]
    %v247 = vld [vmem:[#allocation8 + $0xb8] sm:$0xff]
    %v248 = vld [vmem:[#allocation8 + $0xc0] sm:$0xff]
    %v249 = vld [vmem:[#allocation8 + $0xc8] sm:$0xff]
    %v250 = vld [vmem:[#allocation8 + $0xd0] sm:$0xff]
    %v251 = vld [vmem:[#allocation8 + $0xd8] sm:$0xff]
    %v252 = vld [vmem:[#allocation8 + $0xe0] sm:$0xff]
    %v253 = vld [vmem:[#allocation8 + $0xe8] sm:$0xff]
    %v254 = vld [vmem:[#allocation8 + $0xf0] sm:$0xff]
    %v255 = vld [vmem:[#allocation8 + $0xf8] sm:$0xff]
    %v256 = vld [vmem:[#allocation8 + $0x100] sm:$0xff]
    %v257 = vld [vmem:[#allocation8 + $0x108] sm:$0xff]
    %v258 = vld [vmem:[#allocation8 + $0x110] sm:$0xff]
    %v259 = vld [vmem:[#allocation8 + $0x118] sm:$0xff]
    %v260 = vld [vmem:[#allocation8 + $0x120] sm:$0xff]
    %v261 = vld [vmem:[#allocation8 + $0x128] sm:$0xff]
    %v262 = vld [vmem:[#allocation8 + $0x130] sm:$0xff]
    %v263 = vld [vmem:[#allocation8 + $0x138] sm:$0xff]
    %v264 = vld [vmem:[#allocation8 + $0x140] sm:$0xff]
    %v265 = vld [vmem:[#allocation8 + $0x148] sm:$0xff]
    %v266 = vld [vmem:[#allocation8 + $0x150] sm:$0xff]
    %v267 = vld [vmem:[#allocation8 + $0x158] sm:$0xff]
    %v268 = vld [vmem:[#allocation8 + $0x160] sm:$0xff]
    %v269 = vld [vmem:[#allocation8 + $0x168] sm:$0xff]
    %v270 = vld [vmem:[#allocation8 + $0x170] sm:$0xff]
    %v271 = vld [vmem:[#allocation8 + $0x178] sm:$0xff]
    %v272 = vld [vmem:[#allocation8 + $0x180] sm:$0xff]
    %v273 = vld [vmem:[#allocation8 + $0x188] sm:$0xff]
    %v274 = vld [vmem:[#allocation8 + $0x190] sm:$0xff]
    %v275 = vld [vmem:[#allocation8 + $0x198] sm:$0xff]
    %v276 = vld [vmem:[#allocation8 + $0x1a0] sm:$0xff]
    %v277 = vld [vmem:[#allocation8 + $0x1a8] sm:$0xff]
    %v278 = vld [vmem:[#allocation8 + $0x1b0] sm:$0xff]
    %v279 = vld [vmem:[#allocation8 + $0x1b8] sm:$0xff]
    %v280 = vld [vmem:[#allocation8 + $0x1c0] sm:$0xff]
    %v281 = vld [vmem:[#allocation8 + $0x1c8] sm:$0xff]
    %v282 = vld [vmem:[#allocation8 + $0x1d0] sm:$0xff]
    %v283 = vld [vmem:[#allocation8 + $0x1d8] sm:$0xff]
    %v284 = vld [vmem:[#allocation8 + $0x1e0] sm:$0xff]
    %v285 = vld [vmem:[#allocation8 + $0x1e8] sm:$0xff]
    %v286 = vld [vmem:[#allocation8 + $0x1f0] sm:$0xff]
    %v287 = vld [vmem:[#allocation8 + $0x1f8] sm:$0xff]
    %v288 = vld [vmem:[#allocation8 + $0x200] sm:$0xff]
    %v289 = vld [vmem:[#allocation8 + $0x208] sm:$0xff]
    %v290 = vld [vmem:[#allocation8 + $0x210] sm:$0xff]
    %v291 = vld [vmem:[#allocation8 + $0x218] sm:$0xff]
    %v292 = vld [vmem:[#allocation8 + $0x220] sm:$0xff]
    %v293 = vld [vmem:[#allocation8 + $0x228] sm:$0xff]
    %v294 = vld [vmem:[#allocation8 + $0x230] sm:$0xff]
    %v295 = vld [vmem:[#allocation8 + $0x238] sm:$0xff]
    %v296 = vld [vmem:[#allocation8 + $0x240] sm:$0xff]
    %v297 = vld [vmem:[#allocation8 + $0x248] sm:$0xff]
    %v298 = vld [vmem:[#allocation8 + $0x250] sm:$0xff]
    %v299 = vld [vmem:[#allocation8 + $0x258] sm:$0xff]
    %v300 = vld [vmem:[#allocation8 + $0x260] sm:$0xff]
    %v301 = vld [vmem:[#allocation8 + $0x268] sm:$0xff]
    %v302 = vld [vmem:[#allocation8 + $0x270] sm:$0xff]
    %v303 = vld [vmem:[#allocation8 + $0x278] sm:$0xff]
    %v304 = vld [vmem:[#allocation8 + $0x280] sm:$0xff]
    %v305 = vld [vmem:[#allocation8 + $0x288] sm:$0xff]
    %v306 = vld [vmem:[#allocation8 + $0x290] sm:$0xff]
    %v307 = vld [vmem:[#allocation8 + $0x298] sm:$0xff]
    %v308 = vld [vmem:[#allocation8 + $0x2a0] sm:$0xff]
    %v309 = vld [vmem:[#allocation8 + $0x2a8] sm:$0xff]
    %v310 = vld [vmem:[#allocation8 + $0x2b0] sm:$0xff]
    %v311 = vld [vmem:[#allocation8 + $0x2b8] sm:$0xff]
    %v312 = vld [vmem:[#allocation8 + $0x2c0] sm:$0xff]
    %v313 = vld [vmem:[#allocation8 + $0x2c8] sm:$0xff]
    %v314 = vld [vmem:[#allocation8 + $0x2d0] sm:$0xff]
    %v315 = vld [vmem:[#allocation8 + $0x2d8] sm:$0xff]
    %v316 = vld [vmem:[#allocation8 + $0x2e0] sm:$0xff]
    %v317 = vld [vmem:[#allocation8 + $0x2e8] sm:$0xff]
    %v318 = vld [vmem:[#allocation8 + $0x2f0] sm:$0xff]
    %v319 = vld [vmem:[#allocation8 + $0x2f8] sm:$0xff]
    %v320 = vld [vmem:[%s4] sm:$0x3f]
    %v322 = vlaneseq
    %v323 = vshrl.u32 %v322, 7
    %v324 = vsub.s32 0, %v323
    %v325 = vrot.slane %v320, %v324
    %v326 = vlaneseq
    %v327 = vshrl.u32 %v326, 7
    %v328 = vsub.s32 1, %v327
    %v329 = vrot.slane %v320, %v328
    %v330 = vlaneseq
    %v331 = vshrl.u32 %v330, 7
    %v332 = vsub.s32 2, %v331
    %v333 = vrot.slane %v320, %v332
    %v334 = vlaneseq
    %v335 = vshrl.u32 %v334, 7
    %v336 = vsub.s32 3, %v335
    %v337 = vrot.slane %v320, %v336
    %v338 = vlaneseq
    %v339 = vshrl.u32 %v338, 7
    %v340 = vsub.s32 4, %v339
    %v341 = vrot.slane %v320, %v340
    %v342 = vlaneseq
    %v343 = vshrl.u32 %v342, 7
    %v344 = vsub.s32 5, %v343
    %v345 = vrot.slane %v320, %v344
    %352 = vmatprep.subr.mxu0 %v315
    %353 = vmatpush1.msra.mxu0 %v314
    %354 = vmatprep.subr.mxu0 %v309
    %355 = vmatpush1.msra.mxu0 %v308
    %356 = vmatprep.subr.mxu0 %v303
    %357 = vmatpush1.msra.mxu0 %v302
    %358 = vmatprep.subr.mxu0 %v297
    %359 = vmatpush1.msra.mxu0 %v296
    %360 = vmatprep.subr.mxu0 %v291
    %361 = vmatpush1.msra.mxu0 %v290
    %362 = vmatprep.subr.mxu0 %v285
    %363 = vmatpush1.msra.mxu0 %v284
    %364 = vmatprep.subr.mxu0 %v279
    %365 = vmatpush1.msra.mxu0 %v278
    %366 = vmatprep.subr.mxu0 %v273
    %367 = vmatpush1.msra.mxu0 %v272
    %368 = vmatprep.subr.mxu0 %v267
    %369 = vmatpush1.msra.mxu0 %v266
    %370 = vmatprep.subr.mxu0 %v261
    %371 = vmatpush1.msra.mxu0 %v260
    %372 = vmatprep.subr.mxu0 %v255
    %373 = vmatpush1.msra.mxu0 %v254
    %374 = vmatprep.subr.mxu0 %v249
    %375 = vmatpush1.msra.mxu0 %v248
    %376 = vmatprep.subr.mxu0 %v243
    %377 = vmatpush1.msra.mxu0 %v242
    %378 = vmatprep.subr.mxu0 %v237
    %379 = vmatpush1.msra.mxu0 %v236
    %380 = vmatprep.subr.mxu0 %v231
    %381 = vmatpush1.msra.mxu0 %v230
    %382 = vmatprep.subr.mxu0 %v225
    %383 = vmatpush1.msra.mxu0 %v224
    %384 = vmatprep.subr.mxu0 0.0
    %385 = vmatpush2.msra.mxu0 0.0
    %386 = vmatprep.subr.mxu0 0.0
    %387 = vmatpush2.msra.mxu0 0.0
    %388 = vmatprep.subr.mxu0 0.0
    %389 = vmatpush2.msra.mxu0 0.0
    %390 = vmatprep.subr.mxu0 0.0
    %391 = vmatpush2.msra.mxu0 0.0
    %392 = vmatprep.subr.mxu0 0.0
    %393 = vmatpush2.msra.mxu0 0.0
    %394 = vmatprep.subr.mxu0 0.0
    %395 = vmatpush2.msra.mxu0 0.0
    %396 = vmatprep.subr.mxu0 0.0
    %397 = vmatpush2.msra.mxu0 0.0
    %398 = vmatprep.subr.mxu0 0.0
    %399 = vmatpush2.msra.mxu0 0.0
    %400 = vmatprep.subr.mxu0 0.0
    %401 = vmatpush2.msra.mxu0 0.0
    %402 = vmatprep.subr.mxu0 0.0
    %403 = vmatpush2.msra.mxu0 0.0
    %404 = vmatprep.subr.mxu0 0.0
    %405 = vmatpush2.msra.mxu0 0.0
    %406 = vmatprep.subr.mxu0 0.0
    %407 = vmatpush2.msra.mxu0 0.0
    %408 = vmatprep.subr.mxu0 0.0
    %409 = vmatpush2.msra.mxu0 0.0
    %410 = vmatprep.subr.mxu0 0.0
    %411 = vmatpush2.msra.mxu0 0.0
    %412 = vmatprep.subr.mxu0 0.0
    %413 = vmatpush2.msra.mxu0 0.0
    %414 = vmatprep.subr.mxu0 0.0
    %415 = vmatpush2.msra.mxu0 0.0
    %416 = vmatprep.mubr.f32.mxu0 0.0
    %417 = vmatmul.mubr.f32.gmra.mxu0 %v222
    %v418 = vpop.f32.mrf.mxu0
    %v419 = vadd.f32 %v325, %v418
    %v420 = vpop.f32.mrf.mxu0
    %v421 = vadd.f32 %v329, %v420
    %422 = vmatprep.mubr.f32.mxu0 0.0
    %423 = vmatmul.mubr.f32.gmra.mxu0 %v223
    %v424 = vpop.f32.mrf.mxu0
    %v425 = vadd.f32 %v325, %v424
    %v426 = vpop.f32.mrf.mxu0
    %v427 = vadd.f32 %v329, %v426
    %428 = vdwg.mxu0
    %429 = vmatprep.subr.mxu0 %v317
    %430 = vmatpush1.msra.mxu0 %v316
    %431 = vmatprep.subr.mxu0 %v311
    %432 = vmatpush1.msra.mxu0 %v310
    %433 = vmatprep.subr.mxu0 %v305
    %434 = vmatpush1.msra.mxu0 %v304
    %435 = vmatprep.subr.mxu0 %v299
    %436 = vmatpush1.msra.mxu0 %v298
    %437 = vmatprep.subr.mxu0 %v293
    %438 = vmatpush1.msra.mxu0 %v292
    %439 = vmatprep.subr.mxu0 %v287
    %440 = vmatpush1.msra.mxu0 %v286
    %441 = vmatprep.subr.mxu0 %v281
    %442 = vmatpush1.msra.mxu0 %v280
    %443 = vmatprep.subr.mxu0 %v275
    %444 = vmatpush1.msra.mxu0 %v274
    %445 = vmatprep.subr.mxu0 %v269
    %446 = vmatpush1.msra.mxu0 %v268
    %447 = vmatprep.subr.mxu0 %v263
    %448 = vmatpush1.msra.mxu0 %v262
    %449 = vmatprep.subr.mxu0 %v257
    %450 = vmatpush1.msra.mxu0 %v256
    %451 = vmatprep.subr.mxu0 %v251
    %452 = vmatpush1.msra.mxu0 %v250
    %453 = vmatprep.subr.mxu0 %v245
    %454 = vmatpush1.msra.mxu0 %v244
    %455 = vmatprep.subr.mxu0 %v239
    %456 = vmatpush1.msra.mxu0 %v238
    %457 = vmatprep.subr.mxu0 %v233
    %458 = vmatpush1.msra.mxu0 %v232
    %459 = vmatprep.subr.mxu0 %v227
    %460 = vmatpush1.msra.mxu0 %v226
    %461 = vmatprep.subr.mxu0 0.0
    %462 = vmatpush2.msra.mxu0 0.0
    %463 = vmatprep.subr.mxu0 0.0
    %464 = vmatpush2.msra.mxu0 0.0
    %465 = vmatprep.subr.mxu0 0.0
    %466 = vmatpush2.msra.mxu0 0.0
    %467 = vmatprep.subr.mxu0 0.0
    %468 = vmatpush2.msra.mxu0 0.0
    %469 = vmatprep.subr.mxu0 0.0
    %470 = vmatpush2.msra.mxu0 0.0
    %471 = vmatprep.subr.mxu0 0.0
    %472 = vmatpush2.msra.mxu0 0.0
    %473 = vmatprep.subr.mxu0 0.0
    %474 = vmatpush2.msra.mxu0 0.0
    %475 = vmatprep.subr.mxu0 0.0
    %476 = vmatpush2.msra.mxu0 0.0
    %477 = vmatprep.subr.mxu0 0.0
    %478 = vmatpush2.msra.mxu0 0.0
    %479 = vmatprep.subr.mxu0 0.0
    %480 = vmatpush2.msra.mxu0 0.0
    %481 = vmatprep.subr.mxu0 0.0
    %482 = vmatpush2.msra.mxu0 0.0
    %483 = vmatprep.subr.mxu0 0.0
    %484 = vmatpush2.msra.mxu0 0.0
    %485 = vmatprep.subr.mxu0 0.0
    %486 = vmatpush2.msra.mxu0 0.0
    %487 = vmatprep.subr.mxu0 0.0
    %488 = vmatpush2.msra.mxu0 0.0
    %489 = vmatprep.subr.mxu0 0.0
    %490 = vmatpush2.msra.mxu0 0.0
    %491 = vmatprep.subr.mxu0 0.0
    %492 = vmatpush2.msra.mxu0 0.0
    %493 = vmatprep.mubr.f32.mxu0 0.0
    %494 = vmatmul.mubr.f32.gmra.mxu0 %v222
    %v495 = vpop.f32.mrf.mxu0
    %v496 = vadd.f32 %v333, %v495
    %v497 = vpop.f32.mrf.mxu0
    %v498 = vadd.f32 %v337, %v497
    %499 = vmatprep.mubr.f32.mxu0 0.0
    %500 = vmatmul.mubr.f32.gmra.mxu0 %v223
    %v501 = vpop.f32.mrf.mxu0
    %v502 = vadd.f32 %v333, %v501
    %v503 = vpop.f32.mrf.mxu0
    %v504 = vadd.f32 %v337, %v503
    %505 = vdwg.mxu0
    %506 = vmatprep.subr.mxu0 %v319
    %507 = vmatpush1.msra.mxu0 %v318
    %508 = vmatprep.subr.mxu0 %v313
    %509 = vmatpush1.msra.mxu0 %v312
    %510 = vmatprep.subr.mxu0 %v307
    %511 = vmatpush1.msra.mxu0 %v306
    %512 = vmatprep.subr.mxu0 %v301
    %513 = vmatpush1.msra.mxu0 %v300
    %514 = vmatprep.subr.mxu0 %v295
    %515 = vmatpush1.msra.mxu0 %v294
    %516 = vmatprep.subr.mxu0 %v289
    %517 = vmatpush1.msra.mxu0 %v288
    %518 = vmatprep.subr.mxu0 %v283
    %519 = vmatpush1.msra.mxu0 %v282
    %520 = vmatprep.subr.mxu0 %v277
    %521 = vmatpush1.msra.mxu0 %v276
    %522 = vmatprep.subr.mxu0 %v271
    %523 = vmatpush1.msra.mxu0 %v270
    %524 = vmatprep.subr.mxu0 %v265
    %525 = vmatpush1.msra.mxu0 %v264
    %526 = vmatprep.subr.mxu0 %v259
    %527 = vmatpush1.msra.mxu0 %v258
    %528 = vmatprep.subr.mxu0 %v253
    %529 = vmatpush1.msra.mxu0 %v252
    %530 = vmatprep.subr.mxu0 %v247
    %531 = vmatpush1.msra.mxu0 %v246
    %532 = vmatprep.subr.mxu0 %v241
    %533 = vmatpush1.msra.mxu0 %v240
    %534 = vmatprep.subr.mxu0 %v235
    %535 = vmatpush1.msra.mxu0 %v234
    %536 = vmatprep.subr.mxu0 %v229
    %537 = vmatpush1.msra.mxu0 %v228
    %538 = vmatprep.subr.mxu0 0.0
    %539 = vmatpush2.msra.mxu0 0.0
    %540 = vmatprep.subr.mxu0 0.0
    %541 = vmatpush2.msra.mxu0 0.0
    %542 = vmatprep.subr.mxu0 0.0
    %543 = vmatpush2.msra.mxu0 0.0
    %544 = vmatprep.subr.mxu0 0.0
    %545 = vmatpush2.msra.mxu0 0.0
    %546 = vmatprep.subr.mxu0 0.0
    %547 = vmatpush2.msra.mxu0 0.0
    %548 = vmatprep.subr.mxu0 0.0
    %549 = vmatpush2.msra.mxu0 0.0
    %550 = vmatprep.subr.mxu0 0.0
    %551 = vmatpush2.msra.mxu0 0.0
    %552 = vmatprep.subr.mxu0 0.0
    %553 = vmatpush2.msra.mxu0 0.0
    %554 = vmatprep.subr.mxu0 0.0
    %555 = vmatpush2.msra.mxu0 0.0
    %556 = vmatprep.subr.mxu0 0.0
    %557 = vmatpush2.msra.mxu0 0.0
    %558 = vmatprep.subr.mxu0 0.0
    %559 = vmatpush2.msra.mxu0 0.0
    %560 = vmatprep.subr.mxu0 0.0
    %561 = vmatpush2.msra.mxu0 0.0
    %562 = vmatprep.subr.mxu0 0.0
    %563 = vmatpush2.msra.mxu0 0.0
    %564 = vmatprep.subr.mxu0 0.0
    %565 = vmatpush2.msra.mxu0 0.0
    %566 = vmatprep.subr.mxu0 0.0
    %567 = vmatpush2.msra.mxu0 0.0
    %568 = vmatprep.subr.mxu0 0.0
    %569 = vmatpush2.msra.mxu0 0.0
    %570 = vmatprep.mubr.f32.mxu0 0.0
    %571 = vmatmul.mubr.f32.gmra.mxu0 %v222
    %v572 = vpop.f32.mrf.mxu0
    %v573 = vadd.f32 %v341, %v572
    %v574 = vpop.f32.mrf.mxu0
    %v575 = vadd.f32 %v345, %v574
    %576 = vmatprep.mubr.f32.mxu0 0.0
    %577 = vmatmul.mubr.f32.gmra.mxu0 %v223
    %v578 = vpop.f32.mrf.mxu0
    %v579 = vadd.f32 %v341, %v578
    %v580 = vpop.f32.mrf.mxu0
    %v581 = vadd.f32 %v345, %v580
    %582 = vdwg.mxu0
    %583 = vst [vmem:[#allocation10] sm:$0xff] %v419
    %584 = vst [vmem:[#allocation10 + $0x8] sm:$0xff] %v421
    %585 = vst [vmem:[#allocation10 + $0x10] sm:$0xff] %v496
    %586 = vst [vmem:[#allocation10 + $0x18] sm:$0xff] %v498
    %587 = vst [vmem:[#allocation10 + $0x20] sm:$0xff] %v573
    %588 = vst [vmem:[#allocation10 + $0x28] sm:$0xff] %v575
    %589 = vst [vmem:[#allocation10 + $0x30] sm:$0xff] %v425
    %590 = vst [vmem:[#allocation10 + $0x38] sm:$0xff] %v427
    %591 = vst [vmem:[#allocation10 + $0x40] sm:$0xff] %v502
    %592 = vst [vmem:[#allocation10 + $0x48] sm:$0xff] %v504
    %593 = vst [vmem:[#allocation10 + $0x50] sm:$0xff] %v579
    %594 = vst [vmem:[#allocation10 + $0x58] sm:$0xff] %v581
    // Predicated region
    $region38: #{tpu_custom_call.1} parent=1 // pred_check
      _
    $region39: #{tpu_custom_call.1} parent=1 // pred_check_branch
      %596 = sbr.rel (0) target = $region41
    $region40: #{tpu_custom_call.1} parent=1 // pred_region
      %s598 = ssub.s32 1536, 1536
      %599 = vsyncadd [#allocation4], %s598
      %s600 = sshll.u32 [#allocation10], 4
      %s601 = int_to_ptr.vmem [resolvable:$true] %s600
      %606 = dma.vmem_to_hbm [thread:$0]  %s601, 1536, %s5, [#allocation4], 768, 768, 48
    $region41: #{tpu_custom_call.1} parent=1 // pred_fallthru
      _
    // Predicated region
    $region42: #{tpu_custom_call.1} parent=1 // pred_check
      _
    $region43: #{tpu_custom_call.1} parent=1 // pred_check_branch
      %608 = sbr.rel (0) target = $region45
    $region44: #{tpu_custom_call.1} parent=1 // pred_region
      %609 = dma.done [#allocation4], 1536
    $region45: #{tpu_custom_call.1} parent=1 // pred_fallthru
      _
    %610 = vsyncpa [#allocation3], 1
    %611 = vsyncpa [#allocation6], 1
    %612 = vsyncpa [#allocation9], 1
    %613 = vsyncpa [#allocation4], 1

</llo_original>
